<compile_context>
chip_gen: v6e
topology: v6e:2x2x1
jax: 0.10.0
libtpu: 0.0.40
codegen_flags: <defaults>
</compile_context>

<pallas_src>
import jax
import jax.numpy as jnp
from jax.experimental import pallas as pl
from jax.experimental.pallas import tpu as pltpu

EPS = 1e-7
DICE_SMOOTH = 1.0


def _round_up(x, m):
    return ((x + m - 1) // m) * m


# --------------------------- fused reduction kernel -------------------------
def _fused_kernel(pred_ref, tgt_ref, mask_ref,
                  sbce_ref, stm_ref, spm_ref, sint_ref):
    hw = pl.program_id(1)

    @pl.when(hw == 0)
    def _():
        sbce_ref[...] = jnp.zeros_like(sbce_ref)
        stm_ref[...] = jnp.zeros_like(stm_ref)
        spm_ref[...] = jnp.zeros_like(spm_ref)
        sint_ref[...] = jnp.zeros_like(sint_ref)

    x = pred_ref[0].astype(jnp.float32)    # (C, T) logits
    t = tgt_ref[0].astype(jnp.float32)     # (C, T) targets
    m = mask_ref[0].astype(jnp.float32)    # (1, T) mask (0 in any padded lanes)

    # One exp per element, shared between sigmoid and the BCE log term.
    e = jnp.exp(-jnp.abs(x))
    log1pe = jnp.log1p(e)
    # Stable sigmoid derived from the same e (exact division keeps the 1e-5
    # reference check; pl.reciprocal(1+e, approx=True) is a further free switch
    # if a looser tolerance is acceptable).
    p = jnp.where(x >= 0.0, 1.0, e) / (1.0 + e)

    # Numerically stable elementwise BCE-with-logits (matches PyTorch).
    bce = jnp.maximum(x, 0.0) - x * t + log1pe

    mb = m * bce                                                        # (C, T)
    sbce_ref[0] += jnp.sum((1.0 + p + t) * mb, axis=1, keepdims=True)   # (C, 1)

    pm = p * m
    tm = t * m
    stm_ref[0] += jnp.sum(tm, axis=1, keepdims=True)                    # (C, 1)
    spm_ref[0] += jnp.sum(pm, axis=1, keepdims=True)                    # (C, 1)
    sint_ref[0] += jnp.sum(pm * tm, axis=1, keepdims=True)              # (C, 1)


# ---------------- Wrapper ----------------------------------------------------
def mla_cw_dice_loss(pred, target, mask, l1=1.0, hw_tile=8192):
    """Forward pass of MLACWDiceLoss.  pred/target: (N,C,H,W); mask: (N,H,W)."""
    N, C, H, W = pred.shape
    HW = H * W

    # Lane-axis tile: multiple of 128, capped at hw_tile.  With the default
    # T=8192, (2C+1)*T*4 bytes x2 buffers stays well inside the 32 MiB scoped
    # VMEM default on all of v5e/v6e/v7x; shrink hw_tile for very large C.
    T = min(int(hw_tile), _round_up(HW, 128))
    assert T % 128 == 0
    HW_pad = _round_up(HW, T)
    n_hw = HW_pad // T

    # Stream native dtypes; cast to f32 only inside the kernel (no HBM copies).
    pred_r = pred.reshape(N, C, HW)
    tgt_r = target.reshape(N, C, HW)
    mask_r = mask.reshape(N, 1, HW)
    if HW_pad != HW:
        padw = ((0, 0), (0, 0), (0, HW_pad - HW))
        pred_r = jnp.pad(pred_r, padw)
        tgt_r = jnp.pad(tgt_r, padw)
        mask_r = jnp.pad(mask_r, padw)   # padded lanes: mask=0 -> contribute 0

    out_sd = jax.ShapeDtypeStruct((N, C, 1), jnp.float32)
    out_map = lambda n, hw: (n, 0, 0)

    bytes_accessed = int(
        N * HW_pad * (C * (pred_r.dtype.itemsize + tgt_r.dtype.itemsize)
                      + mask_r.dtype.itemsize) + 4 * N * C * 4)
    cost = pl.CostEstimate(flops=int(20 * N * C * HW_pad),
                           transcendentals=int(3 * N * C * HW_pad),
                           bytes_accessed=bytes_accessed)

    s_bce, s_tm, s_pm, s_int = pl.pallas_call(
        _fused_kernel,
        out_shape=(out_sd, out_sd, out_sd, out_sd),
        grid_spec=pltpu.PrefetchScalarGridSpec(
            num_scalar_prefetch=0,
            grid=(N, n_hw),                            # reduction (HW) axis last
            in_specs=[
                pl.BlockSpec((1, C, T), lambda n, hw: (n, 0, hw)),
                pl.BlockSpec((1, C, T), lambda n, hw: (n, 0, hw)),
                pl.BlockSpec((1, 1, T), lambda n, hw: (n, 0, hw)),
            ],
            out_specs=[pl.BlockSpec((1, C, 1), out_map) for _ in range(4)],
        ),
        compiler_params=pltpu.CompilerParams(
            dimension_semantics=("parallel", "arbitrary")),
        cost_estimate=cost,
    )(pred_r, tgt_r, mask_r)

    s_bce = s_bce[..., 0]    # (N, C)
    s_tm = s_tm[..., 0]
    s_pm = s_pm[..., 0]
    s_int = s_int[..., 0]

    # ----- tiny (C,)-sized glue: adaptive class weight (single call, itr=1) ----
    sum_class = jnp.sum(s_tm, axis=0)                        # (C,)
    weight = sum_class / (jnp.sum(sum_class) + EPS)
    mfb = jnp.mean(weight) / (weight + EPS)
    mfb = mfb / (jnp.sum(mfb) + EPS)

    # loss_bce = sum over C then mean over (N, H, W).
    # TODO(synk): MaskBinaryCrossEntropy omits reduction='none' in its inner
    # F.binary_cross_entropy_with_logits call; following the module's evident
    # intent (and the previously reviewed semantics), the BCE is elementwise.
    loss_bce = jnp.dot(jnp.sum(s_bce, axis=0), mfb) / (N * HW)

    # TODO(synk): CustomizeDiceLoss source was not provided; implemented as the
    # standard masked soft-Dice (sigmoid probs, smooth=1, mean over N*C classes).
    dice = (2.0 * s_int + DICE_SMOOTH) / (s_pm + s_tm + DICE_SMOOTH)    # (N, C)
    loss_dice = 1.0 - jnp.mean(dice)

    return (loss_bce + l1 * loss_dice) / (1.0 + l1)


# ---------------- Pure-JAX reference (for correctness check) ----------------
def reference_loss(pred, target, mask, l1=1.0):
    p = jax.nn.sigmoid(pred)
    sum_class = jnp.sum(target * mask[:, None], axis=(0, 2, 3))
    weight = sum_class / (sum_class.sum() + EPS)
    mfb = weight.mean() / (weight + EPS)
    mfb = mfb / (mfb.sum() + EPS)
    acw_pixel = (1.0 + p + target) * mfb[None, :, None, None]
    bce = jnp.maximum(pred, 0.0) - pred * target + jnp.log1p(jnp.exp(-jnp.abs(pred)))
    loss_bce = jnp.sum(acw_pixel * mask[:, None] * bce, axis=1).mean()
    ps = p * mask[:, None]
    ts = target * mask[:, None]
    inter = jnp.sum(ps * ts, axis=(2, 3))
    denom = jnp.sum(ps, axis=(2, 3)) + jnp.sum(ts, axis=(2, 3))
    dice = (2.0 * inter + DICE_SMOOTH) / (denom + DICE_SMOOTH)
    loss_dice = 1.0 - dice.mean()
    return (loss_bce + l1 * loss_dice) / (1.0 + l1)


if __name__ == "__main__":
    key = jax.random.PRNGKey(0)
    k1, k2, k3 = jax.random.split(key, 3)

    N, C, H, W = 2, 4, 16, 16
    pred = jax.random.normal(k1, (N, C, H, W), dtype=jnp.float32)
    target = (jax.random.uniform(k2, (N, C, H, W)) > 0.5).astype(jnp.float32)
    mask = (jax.random.uniform(k3, (N, H, W)) > 0.3).astype(jnp.float32)

    out = mla_cw_dice_loss(pred, target, mask, l1=1.0)
    out = jax.block_until_ready(out)

    ref = reference_loss(pred, target, mask, l1=1.0)
    assert jnp.allclose(out, ref, rtol=1e-5, atol=1e-5), (out, ref)

    print("KERNEL_OK")
</pallas_src>

<mosaic_0001>
module attributes {stable_mosaic.version = 11 : i64} {
  func.func @_fused_kernel(%arg0: i32, %arg1: i32, %arg2: memref<1x4x256xf32, #tpu.memory_space<vmem>>, %arg3: memref<1x4x256xf32, #tpu.memory_space<vmem>>, %arg4: memref<1x1x256xf32, #tpu.memory_space<vmem>>, %arg5: memref<1x4x1xf32, #tpu.memory_space<vmem>>, %arg6: memref<1x4x1xf32, #tpu.memory_space<vmem>>, %arg7: memref<1x4x1xf32, #tpu.memory_space<vmem>>, %arg8: memref<1x4x1xf32, #tpu.memory_space<vmem>>) attributes {dimension_semantics = [#tpu.dimension_semantics<parallel>, #tpu.dimension_semantics<arbitrary>], iteration_bounds = array<i64: 2, 1>, scalar_prefetch = 0 : i64, scratch_operands = 0 : i64, tpu.core_type = #tpu.core_type<tc>, window_params = [{transform_indices = @transform_0, window_bounds = array<i64: 1, 4, 256>}, {transform_indices = @transform_1, window_bounds = array<i64: 1, 4, 256>}, {transform_indices = @transform_2, window_bounds = array<i64: 1, 1, 256>}, {transform_indices = @transform_3, window_bounds = array<i64: 1, 4, 1>}, {transform_indices = @transform_4, window_bounds = array<i64: 1, 4, 1>}, {transform_indices = @transform_5, window_bounds = array<i64: 1, 4, 1>}, {transform_indices = @transform_6, window_bounds = array<i64: 1, 4, 1>}]} {
    %c0_i32 = arith.constant 0 : i32
    %0 = arith.cmpi eq, %arg1, %c0_i32 : i32
    %1 = arith.extui %0 : i1 to i32
    %c0_i32_0 = arith.constant 0 : i32
    %2 = arith.cmpi ne, %1, %c0_i32_0 : i32
    scf.if %2 {
      %cst_42 = arith.constant 0.000000e+00 : f32
      %69 = vector.broadcast %cst_42 : f32 to vector<1x4x1xf32>
      %c0_43 = arith.constant 0 : index
      %c0_44 = arith.constant 0 : index
      %c0_45 = arith.constant 0 : index
      %70 = vector.load %arg5[%c0_43, %c0_44, %c0_45] : memref<1x4x1xf32, #tpu.memory_space<vmem>>, vector<1x4x1xf32>
      tpu.vector_store %arg5[%c0_43, %c0_44, %c0_45], %69 {strides = array<i32>} : memref<1x4x1xf32, #tpu.memory_space<vmem>>, vector<1x4x1xf32>,
      %cst_46 = arith.constant 0.000000e+00 : f32
      %71 = vector.broadcast %cst_46 : f32 to vector<1x4x1xf32>
      %c0_47 = arith.constant 0 : index
      %c0_48 = arith.constant 0 : index
      %c0_49 = arith.constant 0 : index
      %72 = vector.load %arg6[%c0_47, %c0_48, %c0_49] : memref<1x4x1xf32, #tpu.memory_space<vmem>>, vector<1x4x1xf32>
      tpu.vector_store %arg6[%c0_47, %c0_48, %c0_49], %71 {strides = array<i32>} : memref<1x4x1xf32, #tpu.memory_space<vmem>>, vector<1x4x1xf32>,
      %cst_50 = arith.constant 0.000000e+00 : f32
      %73 = vector.broadcast %cst_50 : f32 to vector<1x4x1xf32>
      %c0_51 = arith.constant 0 : index
      %c0_52 = arith.constant 0 : index
      %c0_53 = arith.constant 0 : index
      %74 = vector.load %arg7[%c0_51, %c0_52, %c0_53] : memref<1x4x1xf32, #tpu.memory_space<vmem>>, vector<1x4x1xf32>
      tpu.vector_store %arg7[%c0_51, %c0_52, %c0_53], %73 {strides = array<i32>} : memref<1x4x1xf32, #tpu.memory_space<vmem>>, vector<1x4x1xf32>,
      %cst_54 = arith.constant 0.000000e+00 : f32
      %75 = vector.broadcast %cst_54 : f32 to vector<1x4x1xf32>
      %c0_55 = arith.constant 0 : index
      %c0_56 = arith.constant 0 : index
      %c0_57 = arith.constant 0 : index
      %76 = vector.load %arg8[%c0_55, %c0_56, %c0_57] : memref<1x4x1xf32, #tpu.memory_space<vmem>>, vector<1x4x1xf32>
      tpu.vector_store %arg8[%c0_55, %c0_56, %c0_57], %75 {strides = array<i32>} : memref<1x4x1xf32, #tpu.memory_space<vmem>>, vector<1x4x1xf32>,
    } else {
    }
    %c0 = arith.constant 0 : index
    %c0_1 = arith.constant 0 : index
    %c0_2 = arith.constant 0 : index
    %3 = vector.load %arg2[%c0, %c0_1, %c0_2] : memref<1x4x256xf32, #tpu.memory_space<vmem>>, vector<1x4x256xf32>
    %4 = vector.shape_cast %3 : vector<1x4x256xf32> to vector<4x256xf32>
    %c0_3 = arith.constant 0 : index
    %c0_4 = arith.constant 0 : index
    %c0_5 = arith.constant 0 : index
    %5 = vector.load %arg3[%c0_3, %c0_4, %c0_5] : memref<1x4x256xf32, #tpu.memory_space<vmem>>, vector<1x4x256xf32>
    %6 = vector.shape_cast %5 : vector<1x4x256xf32> to vector<4x256xf32>
    %c0_6 = arith.constant 0 : index
    %c0_7 = arith.constant 0 : index
    %c0_8 = arith.constant 0 : index
    %7 = vector.load %arg4[%c0_6, %c0_7, %c0_8] : memref<1x1x256xf32, #tpu.memory_space<vmem>>, vector<1x1x256xf32>
    %8 = vector.shape_cast %7 : vector<1x1x256xf32> to vector<1x256xf32>
    %9 = math.absf %4 : vector<4x256xf32>
    %cst = arith.constant 0.000000e+00 : f32
    %10 = vector.broadcast %cst : f32 to vector<4x256xf32>
    %11 = arith.subf %10, %9 : vector<4x256xf32>
    %12 = math.exp %11 : vector<4x256xf32>
    %13 = math.log1p %12 : vector<4x256xf32>
    %cst_9 = arith.constant 0.000000e+00 : f32
    %14 = vector.broadcast %cst_9 : f32 to vector<4x256xf32>
    %15 = arith.cmpf oge, %4, %14 : vector<4x256xf32>
    %cst_10 = arith.constant 1.000000e+00 : f32
    %16 = vector.broadcast %cst_10 : f32 to vector<4x256xf32>
    %17 = arith.select %15, %16, %12 : vector<4x256xi1>, vector<4x256xf32>
    %cst_11 = arith.constant 1.000000e+00 : f32
    %18 = vector.broadcast %cst_11 : f32 to vector<4x256xf32>
    %19 = arith.addf %18, %12 : vector<4x256xf32>
    %20 = arith.divf %17, %19 : vector<4x256xf32>
    %cst_12 = arith.constant 0.000000e+00 : f32
    %21 = vector.broadcast %cst_12 : f32 to vector<4x256xf32>
    %22 = arith.maximumf %4, %21 : vector<4x256xf32>
    %23 = arith.mulf %4, %6 : vector<4x256xf32>
    %24 = arith.subf %22, %23 : vector<4x256xf32>
    %25 = arith.addf %24, %13 : vector<4x256xf32>
    %26 = vector.broadcast %8 : vector<1x256xf32> to vector<4x256xf32>
    %27 = arith.mulf %26, %25 : vector<4x256xf32>
    %c0_13 = arith.constant 0 : index
    %c0_14 = arith.constant 0 : index
    %c0_15 = arith.constant 0 : index
    %28 = vector.load %arg5[%c0_13, %c0_14, %c0_15] : memref<1x4x1xf32, #tpu.memory_space<vmem>>, vector<1x4x1xf32>
    %29 = vector.shape_cast %28 : vector<1x4x1xf32> to vector<4x1xf32>
    %cst_16 = arith.constant 1.000000e+00 : f32
    %30 = vector.broadcast %cst_16 : f32 to vector<4x256xf32>
    %31 = arith.addf %30, %20 : vector<4x256xf32>
    %32 = arith.addf %31, %6 : vector<4x256xf32>
    %33 = arith.mulf %32, %27 : vector<4x256xf32>
    %cst_17 = arith.constant dense<0.000000e+00> : vector<4xf32>
    %34 = vector.multi_reduction <add>, %33, %cst_17 [1] : vector<4x256xf32> to vector<4xf32>
    %35 = vector.shape_cast %34 : vector<4xf32> to vector<4x1xf32>
    %36 = arith.addf %29, %35 : vector<4x1xf32>
    %c0_18 = arith.constant 0 : index
    %c0_19 = arith.constant 0 : index
    %c0_20 = arith.constant 0 : index
    %37 = vector.load %arg5[%c0_18, %c0_19, %c0_20] : memref<1x4x1xf32, #tpu.memory_space<vmem>>, vector<1x4x1xf32>
    %38 = vector.shape_cast %37 : vector<1x4x1xf32> to vector<4x1xf32>
    %39 = vector.shape_cast %36 : vector<4x1xf32> to vector<1x4x1xf32>
    tpu.vector_store %arg5[%c0_18, %c0_19, %c0_20], %39 {strides = array<i32>} : memref<1x4x1xf32, #tpu.memory_space<vmem>>, vector<1x4x1xf32>,
    %40 = vector.broadcast %8 : vector<1x256xf32> to vector<4x256xf32>
    %41 = arith.mulf %20, %40 : vector<4x256xf32>
    %42 = vector.broadcast %8 : vector<1x256xf32> to vector<4x256xf32>
    %43 = arith.mulf %6, %42 : vector<4x256xf32>
    %c0_21 = arith.constant 0 : index
    %c0_22 = arith.constant 0 : index
    %c0_23 = arith.constant 0 : index
    %44 = vector.load %arg6[%c0_21, %c0_22, %c0_23] : memref<1x4x1xf32, #tpu.memory_space<vmem>>, vector<1x4x1xf32>
    %45 = vector.shape_cast %44 : vector<1x4x1xf32> to vector<4x1xf32>
    %cst_24 = arith.constant dense<0.000000e+00> : vector<4xf32>
    %46 = vector.multi_reduction <add>, %43, %cst_24 [1] : vector<4x256xf32> to vector<4xf32>
    %47 = vector.shape_cast %46 : vector<4xf32> to vector<4x1xf32>
    %48 = arith.addf %45, %47 : vector<4x1xf32>
    %c0_25 = arith.constant 0 : index
    %c0_26 = arith.constant 0 : index
    %c0_27 = arith.constant 0 : index
    %49 = vector.load %arg6[%c0_25, %c0_26, %c0_27] : memref<1x4x1xf32, #tpu.memory_space<vmem>>, vector<1x4x1xf32>
    %50 = vector.shape_cast %49 : vector<1x4x1xf32> to vector<4x1xf32>
    %51 = vector.shape_cast %48 : vector<4x1xf32> to vector<1x4x1xf32>
    tpu.vector_store %arg6[%c0_25, %c0_26, %c0_27], %51 {strides = array<i32>} : memref<1x4x1xf32, #tpu.memory_space<vmem>>, vector<1x4x1xf32>,
    %c0_28 = arith.constant 0 : index
    %c0_29 = arith.constant 0 : index
    %c0_30 = arith.constant 0 : index
    %52 = vector.load %arg7[%c0_28, %c0_29, %c0_30] : memref<1x4x1xf32, #tpu.memory_space<vmem>>, vector<1x4x1xf32>
    %53 = vector.shape_cast %52 : vector<1x4x1xf32> to vector<4x1xf32>
    %cst_31 = arith.constant dense<0.000000e+00> : vector<4xf32>
    %54 = vector.multi_reduction <add>, %41, %cst_31 [1] : vector<4x256xf32> to vector<4xf32>
    %55 = vector.shape_cast %54 : vector<4xf32> to vector<4x1xf32>
    %56 = arith.addf %53, %55 : vector<4x1xf32>
    %c0_32 = arith.constant 0 : index
    %c0_33 = arith.constant 0 : index
    %c0_34 = arith.constant 0 : index
    %57 = vector.load %arg7[%c0_32, %c0_33, %c0_34] : memref<1x4x1xf32, #tpu.memory_space<vmem>>, vector<1x4x1xf32>
    %58 = vector.shape_cast %57 : vector<1x4x1xf32> to vector<4x1xf32>
    %59 = vector.shape_cast %56 : vector<4x1xf32> to vector<1x4x1xf32>
    tpu.vector_store %arg7[%c0_32, %c0_33, %c0_34], %59 {strides = array<i32>} : memref<1x4x1xf32, #tpu.memory_space<vmem>>, vector<1x4x1xf32>,
    %c0_35 = arith.constant 0 : index
    %c0_36 = arith.constant 0 : index
    %c0_37 = arith.constant 0 : index
    %60 = vector.load %arg8[%c0_35, %c0_36, %c0_37] : memref<1x4x1xf32, #tpu.memory_space<vmem>>, vector<1x4x1xf32>
    %61 = vector.shape_cast %60 : vector<1x4x1xf32> to vector<4x1xf32>
    %62 = arith.mulf %41, %43 : vector<4x256xf32>
    %cst_38 = arith.constant dense<0.000000e+00> : vector<4xf32>
    %63 = vector.multi_reduction <add>, %62, %cst_38 [1] : vector<4x256xf32> to vector<4xf32>
    %64 = vector.shape_cast %63 : vector<4xf32> to vector<4x1xf32>
    %65 = arith.addf %61, %64 : vector<4x1xf32>
    %c0_39 = arith.constant 0 : index
    %c0_40 = arith.constant 0 : index
    %c0_41 = arith.constant 0 : index
    %66 = vector.load %arg8[%c0_39, %c0_40, %c0_41] : memref<1x4x1xf32, #tpu.memory_space<vmem>>, vector<1x4x1xf32>
    %67 = vector.shape_cast %66 : vector<1x4x1xf32> to vector<4x1xf32>
    %68 = vector.shape_cast %65 : vector<4x1xf32> to vector<1x4x1xf32>
    tpu.vector_store %arg8[%c0_39, %c0_40, %c0_41], %68 {strides = array<i32>} : memref<1x4x1xf32, #tpu.memory_space<vmem>>, vector<1x4x1xf32>,
    return
  }
  func.func @transform_0(%arg0: i32, %arg1: i32) -> (i32, i32, i32) {
    %c0_i32 = arith.constant 0 : i32
    %c0_i32_0 = arith.constant 0 : i32
    return %arg0, %c0_i32, %arg1 : i32, i32, i32
  }
  func.func @transform_1(%arg0: i32, %arg1: i32) -> (i32, i32, i32) {
    %c0_i32 = arith.constant 0 : i32
    %c0_i32_0 = arith.constant 0 : i32
    return %arg0, %c0_i32, %arg1 : i32, i32, i32
  }
  func.func @transform_2(%arg0: i32, %arg1: i32) -> (i32, i32, i32) {
    %c0_i32 = arith.constant 0 : i32
    %c0_i32_0 = arith.constant 0 : i32
    return %arg0, %c0_i32, %arg1 : i32, i32, i32
  }
  func.func @transform_3(%arg0: i32, %arg1: i32) -> (i32, i32, i32) {
    %c0_i32 = arith.constant 0 : i32
    %c0_i32_0 = arith.constant 0 : i32
    %c0_i32_1 = arith.constant 0 : i32
    return %arg0, %c0_i32, %c0_i32_0 : i32, i32, i32
  }
  func.func @transform_4(%arg0: i32, %arg1: i32) -> (i32, i32, i32) {
    %c0_i32 = arith.constant 0 : i32
    %c0_i32_0 = arith.constant 0 : i32
    %c0_i32_1 = arith.constant 0 : i32
    return %arg0, %c0_i32, %c0_i32_0 : i32, i32, i32
  }
  func.func @transform_5(%arg0: i32, %arg1: i32) -> (i32, i32, i32) {
    %c0_i32 = arith.constant 0 : i32
    %c0_i32_0 = arith.constant 0 : i32
    %c0_i32_1 = arith.constant 0 : i32
    return %arg0, %c0_i32, %c0_i32_0 : i32, i32, i32
  }
  func.func @transform_6(%arg0: i32, %arg1: i32) -> (i32, i32, i32) {
    %c0_i32 = arith.constant 0 : i32
    %c0_i32_0 = arith.constant 0 : i32
    %c0_i32_1 = arith.constant 0 : i32
    return %arg0, %c0_i32, %c0_i32_0 : i32, i32, i32
  }
}

</mosaic_0001>

<llo_original>
// kernel: tpu_custom_call.1
$region0: #{tpu_custom_call.1}
  #allocation0 [shape = 'u32[]', space=smem, size = 0x4, offset = 0x4, fixed_abs, tag = 'smem constant byte address 0x4 - core index']
  #allocation1 [shape = 'u32[144,128]{1,0:T(1,128)}', space=vmem, size = 0x12000, scoped, tag = 'internal scratch']
  %s0 = inlined_call_operand.hbm [shape: f32[2,4,256], index: 0, kind: input, shape index: {}]
  %s1 = inlined_call_operand.hbm [shape: f32[2,4,256], index: 1, kind: input, shape index: {}]
  %s2 = inlined_call_operand.hbm [shape: f32[2,1,256], index: 2, kind: input, shape index: {}]
  %s3 = inlined_call_operand.vmem [shape: f32[2,4,1], index: 3, kind: output, shape index: {0}]
  %s4 = inlined_call_operand.vmem [shape: f32[2,4,1], index: 4, kind: output, shape index: {1}]
  %s5 = inlined_call_operand.vmem [shape: f32[2,4,1], index: 5, kind: output, shape index: {2}]
  %s6 = inlined_call_operand.vmem [shape: f32[2,4,1], index: 6, kind: output, shape index: {3}]
  %7 = xla_tuple %s3, %s4, %s5, %s6
  %s8 = sld [smem:[#allocation0]]
  $region85: #{tpu_custom_call.1} parent=0
    _
  %s10 = ssub.s32 1, %s8
  %s11 = scalar_select 0, %s10, %s8
  $region1: #{tpu_custom_call.1} parent=0
    #allocation2 [shape = 'u8[8192]{0}', space=vmem, size = 0x2000, scoped, tag = 'input window, operand 0']
    #allocation3 [shape = 's32[2]{0}', space=sflag, size = 0x8, scoped, tag = 'scoped memory for tpu_custom_call.1']
    #allocation4 [shape = 'u8[8192]{0}', space=vmem, size = 0x2000, scoped, tag = 'input window, operand 1']
    #allocation5 [shape = 's32[2]{0}', space=sflag, size = 0x8, scoped, tag = 'scoped memory for tpu_custom_call.1']
    #allocation6 [shape = 'u8[2048]{0}', space=vmem, size = 0x800, scoped, tag = 'input window, operand 2']
    %12 = vsyncpa [#allocation3], 0
    %s13 = scalar_lea.sflag [#allocation3], 1
    %14 = vsyncpa %s13, 0
    %15 = vsyncpa [#allocation5], 0
    %s16 = scalar_lea.sflag [#allocation5], 1
    %17 = vsyncpa %s16, 0
    loop: start=0, step=1, limit=4
    $region2: #{tpu_custom_call.1} parent=1 // loop_pre_header
      _
    $region3: #{tpu_custom_call.1} parent=1 // loop_header
      %s19 = sphi 0, %s23
      %p20 = scmp.ge.s32.totalorder %s19, 4
      %s26 = sphi 0, %s38
      %s27 = sphi 0, %s34
      %s28 = sphi 0, %s26
      %s29 = sphi 0, %s27
      %s30 = sphi 0, %s28
      %s31 = sphi 0, %s29
      %s43 = sphi 0, %s45
      %s46 = sphi 0, %s43
      %s47 = sphi 0, %s46
      %s63 = sphi 0, %s47
      %s71 = sphi 0, %s73
      %s74 = sphi 0, %s71
      %s75 = sphi 0, %s74
      %s91 = sphi 0, %s75
      %s99 = sphi 0, %s101
      %s102 = sphi 0, %s99
      %s103 = sphi 0, %s102
      %s119 = sphi 0, %s103
      %s125 = sphi 0, %s127
      %s128 = sphi 0, %s125
      %s129 = sphi 0, %s128
      %s145 = sphi 0, %s129
      %s151 = sphi 0, %s153
      %s154 = sphi 0, %s151
      %s155 = sphi 0, %s154
      %s171 = sphi 0, %s155
      %s177 = sphi 0, %s179
      %s180 = sphi 0, %s177
      %s181 = sphi 0, %s180
      %s197 = sphi 0, %s181
      %s203 = sphi 0, %s205
      %s206 = sphi 0, %s203
      %s207 = sphi 0, %s206
      %s223 = sphi 0, %s207
    $region4: #{tpu_custom_call.1} parent=1 // loop_header_branch
      %22 = sbr.rel (%p20) target = $region8
    $region5: #{tpu_custom_call.1} parent=1 // loop_body
      %s24 = ssub.s32 %s19, 1
      %s25 = ssub.s32 %s19, 2
      %s32 = sadd.s32 1, %s27
      %p33 = scmp.ge.s32.totalorder %s32, 1
      %s34 = scalar_select %p33, 0, %s32
      %s35 = sadd.s32 1, %s26
      %s36 = scalar_select %p33, %s35, %s26
      %p37 = scmp.ge.s32.totalorder %s36, 2
      %s38 = scalar_select %p37, 0, %s36
      %s39 = ssub.s32 %s26, %s38
      %s40 = ssub.s32 %s27, %s34
      %s41 = sor.u32 %s39, %s40
      %p42 = scmp.eq.s32.totalorder %s41, 0
      %s44 = sadd.s32 %s43, 1
      %s45 = scalar_select %p42, %s43, %s44
      %p48 = pneg %p42
      %p49 = scmp.eq.s32.totalorder %s19, 1
      %p50 = por %p48, %p49
      %p51 = scmp.ne.s32.totalorder %s43, %s46
      %p52 = scmp.eq.s32.totalorder %s19, 0
      %p53 = por %p51, %p52
      %p54 = scmp.ne.s32.totalorder %s43, %s46
      %p55 = scmp.eq.s32.totalorder %s24, 1
      %p56 = por %p54, %p55
      %p57 = scmp.ne.s32.totalorder %s46, %s47
      %p58 = scmp.eq.s32.totalorder %s24, 0
      %p59 = por %p57, %p58
      %p60 = scmp.ne.s32.totalorder %s46, %s47
      %p61 = scmp.eq.s32.totalorder %s25, 1
      %p62 = por %p60, %p61
      %p64 = scmp.ne.s32.totalorder %s47, %s63
      %p65 = scmp.eq.s32.totalorder %s25, 0
      %p66 = por %p64, %p65
      %s67 = ssub.s32 %s26, %s38
      %s68 = ssub.s32 %s27, %s34
      %s69 = sor.u32 %s67, %s68
      %p70 = scmp.eq.s32.totalorder %s69, 0
      %s72 = sadd.s32 %s71, 1
      %s73 = scalar_select %p70, %s71, %s72
      %p76 = pneg %p70
      %p77 = scmp.eq.s32.totalorder %s19, 1
      %p78 = por %p76, %p77
      %p79 = scmp.ne.s32.totalorder %s71, %s74
      %p80 = scmp.eq.s32.totalorder %s19, 0
      %p81 = por %p79, %p80
      %p82 = scmp.ne.s32.totalorder %s71, %s74
      %p83 = scmp.eq.s32.totalorder %s24, 1
      %p84 = por %p82, %p83
      %p85 = scmp.ne.s32.totalorder %s74, %s75
      %p86 = scmp.eq.s32.totalorder %s24, 0
      %p87 = por %p85, %p86
      %p88 = scmp.ne.s32.totalorder %s74, %s75
      %p89 = scmp.eq.s32.totalorder %s25, 1
      %p90 = por %p88, %p89
      %p92 = scmp.ne.s32.totalorder %s75, %s91
      %p93 = scmp.eq.s32.totalorder %s25, 0
      %p94 = por %p92, %p93
      %s95 = ssub.s32 %s26, %s38
      %s96 = ssub.s32 %s27, %s34
      %s97 = sor.u32 %s95, %s96
      %p98 = scmp.eq.s32.totalorder %s97, 0
      %s100 = sadd.s32 %s99, 1
      %s101 = scalar_select %p98, %s99, %s100
      %p104 = pneg %p98
      %p105 = scmp.eq.s32.totalorder %s19, 1
      %p106 = por %p104, %p105
      %p107 = scmp.ne.s32.totalorder %s99, %s102
      %p108 = scmp.eq.s32.totalorder %s19, 0
      %p109 = por %p107, %p108
      %p110 = scmp.ne.s32.totalorder %s99, %s102
      %p111 = scmp.eq.s32.totalorder %s24, 1
      %p112 = por %p110, %p111
      %p113 = scmp.ne.s32.totalorder %s102, %s103
      %p114 = scmp.eq.s32.totalorder %s24, 0
      %p115 = por %p113, %p114
      %p116 = scmp.ne.s32.totalorder %s102, %s103
      %p117 = scmp.eq.s32.totalorder %s25, 1
      %p118 = por %p116, %p117
      %p120 = scmp.ne.s32.totalorder %s103, %s119
      %p121 = scmp.eq.s32.totalorder %s25, 0
      %p122 = por %p120, %p121
      %s123 = ssub.s32 %s26, %s38
      %p124 = scmp.eq.s32.totalorder %s123, 0
      %s126 = sadd.s32 %s125, 1
      %s127 = scalar_select %p124, %s125, %s126
      %p130 = pneg %p124
      %p131 = scmp.eq.s32.totalorder %s19, 1
      %p132 = por %p130, %p131
      %p133 = scmp.ne.s32.totalorder %s125, %s128
      %p134 = scmp.eq.s32.totalorder %s19, 0
      %p135 = por %p133, %p134
      %p136 = scmp.ne.s32.totalorder %s125, %s128
      %p137 = scmp.eq.s32.totalorder %s24, 1
      %p138 = por %p136, %p137
      %p139 = scmp.ne.s32.totalorder %s128, %s129
      %p140 = scmp.eq.s32.totalorder %s24, 0
      %p141 = por %p139, %p140
      %p142 = scmp.ne.s32.totalorder %s128, %s129
      %p143 = scmp.eq.s32.totalorder %s25, 1
      %p144 = por %p142, %p143
      %p146 = scmp.ne.s32.totalorder %s129, %s145
      %p147 = scmp.eq.s32.totalorder %s25, 0
      %p148 = por %p146, %p147
      %s149 = ssub.s32 %s26, %s38
      %p150 = scmp.eq.s32.totalorder %s149, 0
      %s152 = sadd.s32 %s151, 1
      %s153 = scalar_select %p150, %s151, %s152
      %p156 = pneg %p150
      %p157 = scmp.eq.s32.totalorder %s19, 1
      %p158 = por %p156, %p157
      %p159 = scmp.ne.s32.totalorder %s151, %s154
      %p160 = scmp.eq.s32.totalorder %s19, 0
      %p161 = por %p159, %p160
      %p162 = scmp.ne.s32.totalorder %s151, %s154
      %p163 = scmp.eq.s32.totalorder %s24, 1
      %p164 = por %p162, %p163
      %p165 = scmp.ne.s32.totalorder %s154, %s155
      %p166 = scmp.eq.s32.totalorder %s24, 0
      %p167 = por %p165, %p166
      %p168 = scmp.ne.s32.totalorder %s154, %s155
      %p169 = scmp.eq.s32.totalorder %s25, 1
      %p170 = por %p168, %p169
      %p172 = scmp.ne.s32.totalorder %s155, %s171
      %p173 = scmp.eq.s32.totalorder %s25, 0
      %p174 = por %p172, %p173
      %s175 = ssub.s32 %s26, %s38
      %p176 = scmp.eq.s32.totalorder %s175, 0
      %s178 = sadd.s32 %s177, 1
      %s179 = scalar_select %p176, %s177, %s178
      %p182 = pneg %p176
      %p183 = scmp.eq.s32.totalorder %s19, 1
      %p184 = por %p182, %p183
      %p185 = scmp.ne.s32.totalorder %s177, %s180
      %p186 = scmp.eq.s32.totalorder %s19, 0
      %p187 = por %p185, %p186
      %p188 = scmp.ne.s32.totalorder %s177, %s180
      %p189 = scmp.eq.s32.totalorder %s24, 1
      %p190 = por %p188, %p189
      %p191 = scmp.ne.s32.totalorder %s180, %s181
      %p192 = scmp.eq.s32.totalorder %s24, 0
      %p193 = por %p191, %p192
      %p194 = scmp.ne.s32.totalorder %s180, %s181
      %p195 = scmp.eq.s32.totalorder %s25, 1
      %p196 = por %p194, %p195
      %p198 = scmp.ne.s32.totalorder %s181, %s197
      %p199 = scmp.eq.s32.totalorder %s25, 0
      %p200 = por %p198, %p199
      %s201 = ssub.s32 %s26, %s38
      %p202 = scmp.eq.s32.totalorder %s201, 0
      %s204 = sadd.s32 %s203, 1
      %s205 = scalar_select %p202, %s203, %s204
      %p208 = pneg %p202
      %p209 = scmp.eq.s32.totalorder %s19, 1
      %p210 = por %p208, %p209
      %p211 = scmp.ne.s32.totalorder %s203, %s206
      %p212 = scmp.eq.s32.totalorder %s19, 0
      %p213 = por %p211, %p212
      %p214 = scmp.ne.s32.totalorder %s203, %s206
      %p215 = scmp.eq.s32.totalorder %s24, 1
      %p216 = por %p214, %p215
      %p217 = scmp.ne.s32.totalorder %s206, %s207
      %p218 = scmp.eq.s32.totalorder %s24, 0
      %p219 = por %p217, %p218
      %p220 = scmp.ne.s32.totalorder %s206, %s207
      %p221 = scmp.eq.s32.totalorder %s25, 1
      %p222 = por %p220, %p221
      %p224 = scmp.ne.s32.totalorder %s207, %s223
      %p225 = scmp.eq.s32.totalorder %s25, 0
      %p226 = por %p224, %p225
      %p227 = scmp.le.s32.totalorder 1, %s19
      %p228 = scmp.lt.s32.totalorder %s19, 3
      %p229 = pnand %p227, %p228
      %p230 = pneg %p229
      // Predicated region
      $region9: #{tpu_custom_call.1} parent=5 // pred_check
        _
      $region10: #{tpu_custom_call.1} parent=5 // pred_check_branch
        %232 = sbr.rel (%p229) target = $region12
      $region11: #{tpu_custom_call.1} parent=5 // pred_region
        %s233 = ssub.s32 %s19, 1
      $region12: #{tpu_custom_call.1} parent=5 // pred_fallthru
        _
      %p234 = scmp.lt.s32.totalorder %s19, 2
      // Predicated region
      $region13: #{tpu_custom_call.1} parent=5 // pred_check
        %p235 = pneg %p234
      $region14: #{tpu_custom_call.1} parent=5 // pred_check_branch
        %237 = sbr.rel (%p235) target = $region16
      $region15: #{tpu_custom_call.1} parent=5 // pred_region
        // Predicated region
        $region17: #{tpu_custom_call.1} parent=15 // pred_check
          %p238 = pneg %p53
        $region18: #{tpu_custom_call.1} parent=15 // pred_check_branch
          %240 = sbr.rel (%p238) target = $region20
        $region19: #{tpu_custom_call.1} parent=15 // pred_region
          %s241 = sand.u32 %s43, 1
          %s242 = scalar_lea.sflag [#allocation3], %s241
          %s243 = sand.u32 %s43, 1
          %s244 = smul.addr %s243, 8
          %s245 = scalar_lea.vmem [#allocation2], %s244
          %s246 = smul.u32 2, %s27
          %s248 = ssub.s32 128, 128
          %249 = vsyncadd %s242, %s248
          %s250 = smul.addr %s26, 2
          %s251 = sadd.s32 %s246, %s250
          %s252 = smul.addr %s251, 64
          %s253 = scalar_lea.hbm %s0, %s252
          %s255 = sshll.u32 %s245, 4
          %s256 = int_to_ptr.vmem [resolvable:$true] %s255
          %258 = dma.hbm_to_vmem [thread:$0]  %s253, 128, %s256, %s242
        $region20: #{tpu_custom_call.1} parent=15 // pred_fallthru
          _
        // Predicated region
        $region21: #{tpu_custom_call.1} parent=15 // pred_check
          %p259 = pneg %p81
        $region22: #{tpu_custom_call.1} parent=15 // pred_check_branch
          %261 = sbr.rel (%p259) target = $region24
        $region23: #{tpu_custom_call.1} parent=15 // pred_region
          %s262 = sand.u32 %s19, 1
          %s263 = scalar_lea.sflag [#allocation5], %s262
          %s264 = sand.u32 %s71, 1
          %s265 = smul.addr %s264, 8
          %s266 = scalar_lea.vmem [#allocation4], %s265
          %s267 = smul.u32 2, %s27
          %s269 = ssub.s32 128, 128
          %270 = vsyncadd %s263, %s269
          %s271 = smul.addr %s26, 2
          %s272 = sadd.s32 %s267, %s271
          %s273 = smul.addr %s272, 64
          %s274 = scalar_lea.hbm %s1, %s273
          %s276 = sshll.u32 %s266, 4
          %s277 = int_to_ptr.vmem [resolvable:$true] %s276
          %279 = dma.hbm_to_vmem [thread:$0]  %s274, 128, %s277, %s263
        $region24: #{tpu_custom_call.1} parent=15 // pred_fallthru
          _
        // Predicated region
        $region25: #{tpu_custom_call.1} parent=15 // pred_check
          %p280 = pneg %p109
        $region26: #{tpu_custom_call.1} parent=15 // pred_check_branch
          %282 = sbr.rel (%p280) target = $region28
        $region27: #{tpu_custom_call.1} parent=15 // pred_region
          %s283 = sand.u32 %s19, 1
          %s284 = scalar_lea.sflag [#allocation5], %s283
          %s285 = sand.u32 %s99, 1
          %s286 = smul.addr %s285, 2
          %s287 = scalar_lea.vmem [#allocation6], %s286
          %s288 = smul.u32 2, %s27
          %s290 = ssub.s32 32, 32
          %291 = vsyncadd %s284, %s290
          %s292 = smul.addr %s26, 2
          %s293 = sadd.s32 %s288, %s292
          %s294 = smul.addr %s293, 16
          %s295 = scalar_lea.hbm %s2, %s294
          %s297 = sshll.u32 %s287, 4
          %s298 = int_to_ptr.vmem [resolvable:$true] %s297
          %300 = dma.hbm_to_vmem [thread:$0]  %s295, 32, %s298, %s284
        $region28: #{tpu_custom_call.1} parent=15 // pred_fallthru
          _
      $region16: #{tpu_custom_call.1} parent=5 // pred_fallthru
        _
      %p301 = scmp.le.s32.totalorder 1, %s19
      %p302 = scmp.lt.s32.totalorder %s19, 3
      %p303 = pnand %p301, %p302
      %p304 = pneg %p303
      // Predicated region
      $region29: #{tpu_custom_call.1} parent=5 // pred_check
        _
      $region30: #{tpu_custom_call.1} parent=5 // pred_check_branch
        %306 = sbr.rel (%p303) target = $region32
      $region31: #{tpu_custom_call.1} parent=5 // pred_region
        %s307 = ssub.s32 %s19, 1
        %s308 = sand.u32 %s46, 1
        %s309 = scalar_lea.sflag [#allocation3], %s308
        %s310 = sand.u32 %s46, 1
        %s311 = smul.addr %s310, 8
        %s312 = scalar_lea.vmem [#allocation2], %s311
        // Predicated region
        $region33: #{tpu_custom_call.1} parent=31 // pred_check
          %p313 = pneg %p59
        $region34: #{tpu_custom_call.1} parent=31 // pred_check_branch
          %315 = sbr.rel (%p313) target = $region36
        $region35: #{tpu_custom_call.1} parent=31 // pred_region
          %316 = dma.done %s309, 128
        $region36: #{tpu_custom_call.1} parent=31 // pred_fallthru
          _
        %s317 = sand.u32 %s24, 1
        %s318 = scalar_lea.sflag [#allocation5], %s317
        %s319 = sand.u32 %s74, 1
        %s320 = smul.addr %s319, 8
        %s321 = scalar_lea.vmem [#allocation4], %s320
        // Predicated region
        $region37: #{tpu_custom_call.1} parent=31 // pred_check
          %p322 = pneg %p87
        $region38: #{tpu_custom_call.1} parent=31 // pred_check_branch
          %324 = sbr.rel (%p322) target = $region40
        $region39: #{tpu_custom_call.1} parent=31 // pred_region
          %325 = dma.done %s318, 128
        $region40: #{tpu_custom_call.1} parent=31 // pred_fallthru
          _
        %s326 = sand.u32 %s24, 1
        %s327 = scalar_lea.sflag [#allocation5], %s326
        %s328 = sand.u32 %s102, 1
        %s329 = smul.addr %s328, 2
        %s330 = scalar_lea.vmem [#allocation6], %s329
        // Predicated region
        $region41: #{tpu_custom_call.1} parent=31 // pred_check
          %p331 = pneg %p115
        $region42: #{tpu_custom_call.1} parent=31 // pred_check_branch
          %333 = sbr.rel (%p331) target = $region44
        $region43: #{tpu_custom_call.1} parent=31 // pred_region
          %334 = dma.done %s327, 32
        $region44: #{tpu_custom_call.1} parent=31 // pred_fallthru
          _
        %s335 = sand.u32 %s46, 1
        %s336 = scalar_lea.sflag [#allocation3], %s335
        %s337 = sand.u32 %s46, 1
        %s338 = smul.addr %s337, 8
        %s339 = scalar_lea.vmem [#allocation2], %s338
        %p340 = pneg %p59
        %p341 = pneg %p56
        %s342 = sand.u32 %s24, 1
        %s343 = scalar_lea.sflag [#allocation5], %s342
        %s344 = sand.u32 %s74, 1
        %s345 = smul.addr %s344, 8
        %s346 = scalar_lea.vmem [#allocation4], %s345
        %p347 = pneg %p87
        %p348 = pneg %p84
        %s349 = sand.u32 %s24, 1
        %s350 = scalar_lea.sflag [#allocation5], %s349
        %s351 = sand.u32 %s102, 1
        %s352 = smul.addr %s351, 2
        %s353 = scalar_lea.vmem [#allocation6], %s352
        %p354 = pneg %p115
        %p355 = pneg %p112
        %p356 = pneg %p141
        %p357 = pneg %p138
        %p358 = scmp.lt.s32.totalorder %s28, 1
        %s359 = scalar_select %p358, %s28, 1
        %s360 = smul.addr %s359, 4
        %s361 = scalar_lea.vmem %s3, %s360
        %p362 = pneg %p167
        %p363 = pneg %p164
        %p364 = scmp.lt.s32.totalorder %s28, 1
        %s365 = scalar_select %p364, %s28, 1
        %s366 = smul.addr %s365, 4
        %s367 = scalar_lea.vmem %s4, %s366
        %p368 = pneg %p193
        %p369 = pneg %p190
        %p370 = scmp.lt.s32.totalorder %s28, 1
        %s371 = scalar_select %p370, %s28, 1
        %s372 = smul.addr %s371, 4
        %s373 = scalar_lea.vmem %s5, %s372
        %p374 = pneg %p219
        %p375 = pneg %p216
        %p376 = scmp.lt.s32.totalorder %s28, 1
        %s377 = scalar_select %p376, %s28, 1
        %s378 = smul.addr %s377, 4
        %s379 = scalar_lea.vmem %s6, %s378
        %s380 = smul.u32 2, %s29
        %s381 = smul.u32 2, %s29
        %s382 = smul.u32 2, %s29
        %p383 = scmp.lt.s32.totalorder %s28, 1
        %s384 = scalar_select %p383, %s28, 1
        %s385 = smul.addr %s384, 4
        %s386 = scalar_lea.vmem %s3, %s385
        %p387 = scmp.lt.s32.totalorder %s28, 1
        %s388 = scalar_select %p387, %s28, 1
        %s389 = smul.addr %s388, 4
        %s390 = scalar_lea.vmem %s4, %s389
        %p391 = scmp.lt.s32.totalorder %s28, 1
        %s392 = scalar_select %p391, %s28, 1
        %s393 = smul.addr %s392, 4
        %s394 = scalar_lea.vmem %s5, %s393
        %p395 = scmp.lt.s32.totalorder %s28, 1
        %s396 = scalar_select %p395, %s28, 1
        %s397 = smul.addr %s396, 4
        %s398 = scalar_lea.vmem %s6, %s397
        %p399 = scmp.eq.s32.totalorder %s29, 0
        // Predicated region
        $region45: #{tpu_custom_call.1} parent=31 // pred_check
          %p400 = pneg %p399
        $region46: #{tpu_custom_call.1} parent=31 // pred_check_branch
          %402 = sbr.rel (%p400) target = $region48
        $region47: #{tpu_custom_call.1} parent=31 // pred_region
          %vm403 = vcmask 3072
          %404 = vst.msk [vmem:[%s386] sm:$0xf] %vm403, 0.0
          %405 = vst.msk [vmem:[%s390] sm:$0xf] %vm403, 0.0
          %406 = vst.msk [vmem:[%s394] sm:$0xf] %vm403, 0.0
          %407 = vst.msk [vmem:[%s398] sm:$0xf] %vm403, 0.0
        $region48: #{tpu_custom_call.1} parent=31 // pred_fallthru
          _
        %v408 = vld [vmem:[%s312] sm:$0xff]
        %v409 = vld [vmem:[%s321] sm:$0xff]
        %v410 = vld [vmem:[%s330] sm:$0x3]
        %v411 = vand.u32 2147483647, %v408
        %v412 = vsub.f32 0.0, %v411
        %v413 = vmul.f32 %v412, 1.442695
        %v414 = vpow.pop %v413
        %v415 = vadd.f32 %v414, 1.0
        %v416 = vlog2.pop %v415
        %v417 = vmul.f32 %v416, 0.6931472
        %v418 = vmul.f32 -0.5, %v414
        %v419 = vadd.f32 %v418, 1.0
        %v420 = vmul.f32 %v419, %v414
        %v421 = vand.u32 2147483647, %v414
        %vm422 = vcmp.lt.f32.partialorder %v421, 0.0004427343
        %v423 = vsel %vm422, %v420, %v417
        %vm424 = vcmp.ge.f32.partialorder %v408, 0.0
        %v425 = vsel %vm424, 1.0, %v414
        %v426 = vadd.f32 %v414, 1.0
        %v427 = vrcp.pop %v426
        %v428 = vmul.f32 %v425, %v427
        %v429 = vmax.f32 %v408, 0.0
        %v430 = vmul.f32 %v408, %v409
        %v431 = vsub.f32 %v429, %v430
        %v432 = vadd.f32 %v431, %v423
        %v434 = vlaneseq
        %v435 = vshrl.u32 %v434, 7
        %v436 = vsub.s32 0, %v435
        %v437 = vrot.slane %v410, %v436
        %v438 = vlaneseq
        %v439 = vshrl.u32 %v438, 7
        %v440 = vsub.s32 1, %v439
        %v441 = vrot.slane %v410, %v440
        %v445 = vcombine.high %v432, %v432
        %v447 = vmul.f32 %v437, %v432
        %v448 = vmul.f32 %v441, %v445
        %v449 = vld [vmem:[%s386] sm:$0xf]
        %v450 = vadd.f32 %v428, 1.0
        %v451 = vadd.f32 %v450, %v409
        %v454 = vcombine.low %v447, %v448
        %v456 = vmul.f32 %v451, %v454
        %v458 = vcombine.high %v456, %v456
        %vm460 = vcmask 1043456
        %v461 = vsel %vm460, %v456, 0.0
        %v462 = vsel %vm460, %v458, 0.0
        %v463 = vadd.f32 %v461, %v462
        %464 = vadd.xlane.f32.xlu0 %v463
        %v465 = vpop.xlane.xlu0 %464
        %v466 = vadd.f32 %v449, %v465
        %vm467 = vcmask 3072
        %468 = vst.msk [vmem:[%s386] sm:$0xf] %vm467, %v466
        %v469 = vcombine.low %v437, %v441
        %v471 = vmul.f32 %v428, %v469
        %v472 = vmul.f32 %v409, %v469
        %v473 = vld [vmem:[%s390] sm:$0xf]
        %v475 = vcombine.high %v472, %v472
        %v477 = vsel %vm460, %v472, 0.0
        %v478 = vsel %vm460, %v475, 0.0
        %v479 = vadd.f32 %v477, %v478
        %480 = vadd.xlane.f32.xlu0 %v479
        %v481 = vpop.xlane.xlu0 %480
        %v482 = vadd.f32 %v473, %v481
        %483 = vst.msk [vmem:[%s390] sm:$0xf] %vm467, %v482
        %v484 = vld [vmem:[%s394] sm:$0xf]
        %v486 = vcombine.high %v471, %v471
        %v488 = vsel %vm460, %v471, 0.0
        %v489 = vsel %vm460, %v486, 0.0
        %v490 = vadd.f32 %v488, %v489
        %491 = vadd.xlane.f32.xlu0 %v490
        %v492 = vpop.xlane.xlu0 %491
        %v493 = vadd.f32 %v484, %v492
        %494 = vst.msk [vmem:[%s394] sm:$0xf] %vm467, %v493
        %v495 = vld [vmem:[%s398] sm:$0xf]
        %v496 = vmul.f32 %v471, %v472
        %v498 = vcombine.high %v496, %v496
        %v500 = vsel %vm460, %v496, 0.0
        %v501 = vsel %vm460, %v498, 0.0
        %v502 = vadd.f32 %v500, %v501
        %503 = vadd.xlane.f32.xlu0 %v502
        %v504 = vpop.xlane.xlu0 %503
        %v505 = vadd.f32 %v495, %v504
        %506 = vst.msk [vmem:[%s398] sm:$0xf] %vm467, %v505
        %p507 = scmp.lt.s32.totalorder %s28, 1
        %s508 = scalar_select %p507, %s28, 1
        %s509 = smul.addr %s508, 4
        %s510 = scalar_lea.vmem %s3, %s509
        %p511 = scmp.lt.s32.totalorder %s28, 1
        %s512 = scalar_select %p511, %s28, 1
        %s513 = smul.addr %s512, 4
        %s514 = scalar_lea.vmem %s4, %s513
        %p515 = scmp.lt.s32.totalorder %s28, 1
        %s516 = scalar_select %p515, %s28, 1
        %s517 = smul.addr %s516, 4
        %s518 = scalar_lea.vmem %s5, %s517
        %p519 = scmp.lt.s32.totalorder %s28, 1
        %s520 = scalar_select %p519, %s28, 1
        %s521 = smul.addr %s520, 4
        %s522 = scalar_lea.vmem %s6, %s521
        // Predicated region
        $region49: #{tpu_custom_call.1} parent=31 // pred_check
          %p523 = pneg %p138
        $region50: #{tpu_custom_call.1} parent=31 // pred_check_branch
          %525 = sbr.rel (%p523) target = $region52
        $region51: #{tpu_custom_call.1} parent=31 // pred_region
          _
        $region52: #{tpu_custom_call.1} parent=31 // pred_fallthru
          _
        // Predicated region
        $region53: #{tpu_custom_call.1} parent=31 // pred_check
          %p526 = pneg %p164
        $region54: #{tpu_custom_call.1} parent=31 // pred_check_branch
          %528 = sbr.rel (%p526) target = $region56
        $region55: #{tpu_custom_call.1} parent=31 // pred_region
          _
        $region56: #{tpu_custom_call.1} parent=31 // pred_fallthru
          _
        // Predicated region
        $region57: #{tpu_custom_call.1} parent=31 // pred_check
          %p529 = pneg %p190
        $region58: #{tpu_custom_call.1} parent=31 // pred_check_branch
          %531 = sbr.rel (%p529) target = $region60
        $region59: #{tpu_custom_call.1} parent=31 // pred_region
          _
        $region60: #{tpu_custom_call.1} parent=31 // pred_fallthru
          _
        // Predicated region
        $region61: #{tpu_custom_call.1} parent=31 // pred_check
          %p532 = pneg %p216
        $region62: #{tpu_custom_call.1} parent=31 // pred_check_branch
          %534 = sbr.rel (%p532) target = $region64
        $region63: #{tpu_custom_call.1} parent=31 // pred_region
          _
        $region64: #{tpu_custom_call.1} parent=31 // pred_fallthru
          _
      $region32: #{tpu_custom_call.1} parent=5 // pred_fallthru
        _
      %p535 = scmp.le.s32.totalorder 2, %s19
      // Predicated region
      $region65: #{tpu_custom_call.1} parent=5 // pred_check
        %p536 = pneg %p535
      $region66: #{tpu_custom_call.1} parent=5 // pred_check_branch
        %538 = sbr.rel (%p536) target = $region68
      $region67: #{tpu_custom_call.1} parent=5 // pred_region
        %s539 = ssub.s32 %s19, 2
        // Predicated region
        $region69: #{tpu_custom_call.1} parent=67 // pred_check
          %p540 = pneg %p144
        $region70: #{tpu_custom_call.1} parent=67 // pred_check_branch
          %542 = sbr.rel (%p540) target = $region72
        $region71: #{tpu_custom_call.1} parent=67 // pred_region
          %p543 = scmp.lt.s32.totalorder %s30, 1
          %s544 = scalar_select %p543, %s30, 1
          %s545 = smul.addr %s544, 4
          %s546 = scalar_lea.vmem %s3, %s545
        $region72: #{tpu_custom_call.1} parent=67 // pred_fallthru
          _
        // Predicated region
        $region73: #{tpu_custom_call.1} parent=67 // pred_check
          %p547 = pneg %p170
        $region74: #{tpu_custom_call.1} parent=67 // pred_check_branch
          %549 = sbr.rel (%p547) target = $region76
        $region75: #{tpu_custom_call.1} parent=67 // pred_region
          %p550 = scmp.lt.s32.totalorder %s30, 1
          %s551 = scalar_select %p550, %s30, 1
          %s552 = smul.addr %s551, 4
          %s553 = scalar_lea.vmem %s4, %s552
        $region76: #{tpu_custom_call.1} parent=67 // pred_fallthru
          _
        // Predicated region
        $region77: #{tpu_custom_call.1} parent=67 // pred_check
          %p554 = pneg %p196
        $region78: #{tpu_custom_call.1} parent=67 // pred_check_branch
          %556 = sbr.rel (%p554) target = $region80
        $region79: #{tpu_custom_call.1} parent=67 // pred_region
          %p557 = scmp.lt.s32.totalorder %s30, 1
          %s558 = scalar_select %p557, %s30, 1
          %s559 = smul.addr %s558, 4
          %s560 = scalar_lea.vmem %s5, %s559
        $region80: #{tpu_custom_call.1} parent=67 // pred_fallthru
          _
        // Predicated region
        $region81: #{tpu_custom_call.1} parent=67 // pred_check
          %p561 = pneg %p222
        $region82: #{tpu_custom_call.1} parent=67 // pred_check_branch
          %563 = sbr.rel (%p561) target = $region84
        $region83: #{tpu_custom_call.1} parent=67 // pred_region
          %p564 = scmp.lt.s32.totalorder %s30, 1
          %s565 = scalar_select %p564, %s30, 1
          %s566 = smul.addr %s565, 4
          %s567 = scalar_lea.vmem %s6, %s566
        $region84: #{tpu_custom_call.1} parent=67 // pred_fallthru
          _
      $region68: #{tpu_custom_call.1} parent=5 // pred_fallthru
        _
    $region6: #{tpu_custom_call.1} parent=1 // loop_footer
      %s23 = sadd.s32 1, %s19
    $region7: #{tpu_custom_call.1} parent=1 // loop_footer_branch
      %18 = sbr.rel target = $region3
    $region8: #{tpu_custom_call.1} parent=1 // loop_exit
      _
    %568 = vsyncpa [#allocation3], 1
    %s569 = scalar_lea.sflag [#allocation3], 1
    %570 = vsyncpa %s569, 1
    %571 = vsyncpa [#allocation5], 1
    %s572 = scalar_lea.sflag [#allocation5], 1
    %573 = vsyncpa %s572, 1

</llo_original>
